<compile_context>
chip_gen: v7x
topology: tpu7x:2x2x1
jax: 0.10.0
libtpu: 0.0.40
codegen_flags: <defaults>
</compile_context>

<pallas_src>
import functools

import jax
import jax.numpy as jnp
from jax.experimental import pallas as pl
from jax.experimental.pallas import tpu as pltpu


def _round_up(x: int, m: int) -> int:
    return ((x + m - 1) // m) * m


def _chebykan_fused_kernel(*refs, num_layers: int, degree: int, poly_type: str):
    """Fused forward of the whole ChebyKAN stack on one batch tile.

    refs = (x_ref, w_0, ..., w_{L-1}, o_ref)
      x_ref : [TB, width[0]]                         f32
      w_l   : [width[l+1], (degree+1) * width[l]]    bf16  (col index = d*in + i)
      o_ref : [width[-1], TB]                        f32   (batch on the lane axis)
    """
    x_ref = refs[0]
    w_refs = refs[1:1 + num_layers]
    o_ref = refs[1 + num_layers]

    # [TB, in] -> [in, TB]: one transpose (XLU slot) so all elementwise work
    # below is 128-lane dense (batch lives on the lane axis).
    h = jnp.transpose(x_ref[...].astype(jnp.float32), (1, 0))

    for l in range(num_layers):
        t = jnp.tanh(h)                                  # f32 (EUP path)
        two_t = t + t
        # Chebyshev recurrence in f32; only prev/cur stay live as f32, each
        # T_d is cast to bf16 as soon as it is produced (MXU input dtype).
        feats = [jnp.ones(t.shape, jnp.bfloat16)]        # T_0 = 1
        if degree >= 1:
            prev = jnp.ones_like(t)
            cur = two_t if poly_type == "U" else t       # T_1 / U_1
            feats.append(cur.astype(jnp.bfloat16))
            for _ in range(2, degree + 1):
                nxt = two_t * cur - prev
                feats.append(nxt.astype(jnp.bfloat16))
                prev, cur = cur, nxt
        # Stack T_0..T_d along the SUBLANE axis -> [(d+1)*in, TB] feature slab,
        # then ONE MXU matmul per layer (bf16 inputs, f32 accumulation).
        p = jnp.concatenate(feats, axis=0)
        h = jnp.dot(w_refs[l][...], p, preferred_element_type=jnp.float32)

    o_ref[...] = h.astype(o_ref.dtype)                   # lane-dense store


def init_chebykan_params(key, width, degree):
    """Xavier-uniform init matching nn.init.xavier_uniform_ on an
    (in_dim, out_dim, degree+1) tensor, pre-transposed to the kernel layout
    W^T[o, d*in + i] = coeffs[i, o, d] and stored as bfloat16."""
    # TODO(synk): only 'xavier' init is implemented ('he'/'lecun' of the torch
    # module are init-time options and do not affect the forward pass).
    params = []
    for i in range(len(width) - 1):
        in_dim, out_dim = width[i], width[i + 1]
        key, sub = jax.random.split(key)
        # torch fan calc on (in_dim, out_dim, degree+1):
        #   fan_in  = out_dim * (degree+1), fan_out = in_dim * (degree+1)
        fan_in = out_dim * (degree + 1)
        fan_out = in_dim * (degree + 1)
        bound = (6.0 / (fan_in + fan_out)) ** 0.5
        c = jax.random.uniform(
            sub, (in_dim, out_dim, degree + 1), jnp.float32, -bound, bound
        )
        # einsum '...id,iod->...o'  ==>  W^T[o, d*in + i] = c[i, o, d]
        w_t = jnp.transpose(c, (1, 2, 0)).reshape((out_dim, (degree + 1) * in_dim))
        params.append(w_t.astype(jnp.bfloat16))
    return params


def chebykan_forward(x, params, *, degree: int, poly_type: str = "U",
                     block_batch: int = 2048):
    """x: [..., width[0]] -> [..., width[-1]] (same semantics as the torch module)."""
    if poly_type not in ("T", "U"):
        raise ValueError(f"Unknown poly_type: {poly_type}")
    lead = x.shape[:-1]
    in_dim = x.shape[-1]
    out_dim = params[-1].shape[0]
    num_layers = len(params)

    h = x.reshape((-1, in_dim)).astype(jnp.float32)
    B = h.shape[0]

    # Batch tile: multiple of 128 (it is the minor/lane dim of the transposed
    # output block), large to amortize per-grid-step overhead, and capped so
    # the "parallel" batch axis keeps >= 2 steps when there is enough work
    # (v7x megacore: 2 TensorCores). No wrapper-side padding: grid = cdiv and
    # Pallas masks the ragged last tile on read/writeback.
    TB = min(_round_up(block_batch, 128), _round_up(B, 128))
    if B > 256 and pl.cdiv(B, TB) < 2:
        TB = _round_up(pl.cdiv(B, 2), 128)

    kernel = functools.partial(
        _chebykan_fused_kernel,
        num_layers=num_layers, degree=degree, poly_type=poly_type,
    )

    in_specs = [pl.BlockSpec((TB, in_dim), lambda i: (i, 0))]
    for w in params:
        # Full coeff slab, constant block index -> stays VMEM-resident.
        in_specs.append(pl.BlockSpec(w.shape, lambda i: (0, 0)))

    out_t = pl.pallas_call(
        kernel,
        out_shape=jax.ShapeDtypeStruct((out_dim, B), jnp.float32),
        grid=(pl.cdiv(B, TB),),
        in_specs=in_specs,
        out_specs=pl.BlockSpec((out_dim, TB), lambda i: (0, i)),
        compiler_params=pltpu.CompilerParams(
            dimension_semantics=("parallel",),
            # Headroom for larger block_batch sweeps; safely below v7x's
            # 64 MiB physical VMEM, above v5e's 16 MiB scoped default.
            vmem_limit_bytes=48 * 1024 * 1024,
        ),
    )(h, *params)

    # [out_dim, B] -> [B, out_dim]: tiny layout-plumbing transpose wrapper-side
    # (keeps the kernel's output stores 128-lane dense).
    return jnp.transpose(out_t, (1, 0)).reshape(lead + (out_dim,))


def _cheby_polys(t, degree: int, poly_type: str):
    polys = [jnp.ones_like(t)]
    if degree >= 1:
        polys.append(2.0 * t if poly_type == "U" else t)
        for _ in range(2, degree + 1):
            polys.append(2.0 * t * polys[-1] - polys[-2])
    return polys


def _reference_forward(x, params, *, degree: int, poly_type: str = "U",
                       matmul_dtype=jnp.float32):
    """Plain-JAX reference mirroring the PyTorch module (optionally rounding
    the polynomial features to bf16 to match the kernel's MXU inputs).
    params are in the kernel layout: W^T[o, d*in + i] = coeffs[i, o, d]."""
    h = x.astype(jnp.float32)
    for w in params:  # w: [out, (degree+1)*in] bf16
        t = jnp.tanh(h)
        p = jnp.concatenate(_cheby_polys(t, degree, poly_type), axis=-1)
        p = p.astype(matmul_dtype).astype(jnp.float32)
        h = jnp.einsum('...k,ok->...o', p, w.astype(jnp.float32))
    return h


if __name__ == "__main__":
    width = [16, 32, 8]
    degree = 4
    poly_type = "U"

    key = jax.random.PRNGKey(0)
    pkey, xkey = jax.random.split(key)
    params = init_chebykan_params(pkey, width, degree)

    # small input: batch=2, seq=3, input_dim=width[0]=16
    x = jax.random.normal(xkey, (2, 3, width[0]), jnp.float32)

    fwd = jax.jit(functools.partial(chebykan_forward, degree=degree,
                                    poly_type=poly_type))
    out = jax.block_until_ready(fwd(x, params))
    assert out.shape == (2, 3, width[-1]), out.shape

    # Reference that matches the kernel's bf16 matmul inputs (tight check) ...
    ref_bf16 = _reference_forward(x, params, degree=degree, poly_type=poly_type,
                                  matmul_dtype=jnp.bfloat16)
    # ... and the pure-f32 module semantics (loose check: bf16 MXU inputs).
    ref_f32 = _reference_forward(x, params, degree=degree, poly_type=poly_type,
                                 matmul_dtype=jnp.float32)

    assert jnp.allclose(out, ref_bf16, atol=1e-2, rtol=1e-2), \
        "mismatch vs bf16-matched reference"
    assert jnp.allclose(out, ref_f32, atol=5e-2, rtol=5e-2), \
        "mismatch vs f32 reference"

    print("KERNEL_OK")
</pallas_src>

<mosaic_0001>
module attributes {stable_mosaic.version = 11 : i64} {
  func.func @_chebykan_fused_kernel(%arg0: i32, %arg1: memref<128x16xf32, #tpu.memory_space<vmem>>, %arg2: memref<32x80xbf16, #tpu.memory_space<vmem>>, %arg3: memref<8x160xbf16, #tpu.memory_space<vmem>>, %arg4: memref<8x128xf32, #tpu.memory_space<vmem>>) attributes {dimension_semantics = [#tpu.dimension_semantics<parallel>], iteration_bounds = array<i64: 1>, scalar_prefetch = 0 : i64, scratch_operands = 0 : i64, tpu.core_type = #tpu.core_type<tc>, window_params = [{transform_indices = @transform_0, window_bounds = array<i64: 128, 16>}, {pipeline_mode = #tpu.pipeline_mode<synchronous>, transform_indices = @transform_1, window_bounds = array<i64: 32, 80>}, {pipeline_mode = #tpu.pipeline_mode<synchronous>, transform_indices = @transform_2, window_bounds = array<i64: 8, 160>}, {transform_indices = @transform_3, window_bounds = array<i64: 8, 128>}]} {
    %c0 = arith.constant 0 : index
    %c0_0 = arith.constant 0 : index
    %0 = vector.load %arg1[%c0, %c0_0] : memref<128x16xf32, #tpu.memory_space<vmem>>, vector<128x16xf32>
    %1 = tpu.transpose %0, [1, 0] : vector<128x16xf32> -> vector<16x128xf32>
    %2 = math.tanh %1 : vector<16x128xf32>
    %3 = arith.addf %2, %2 : vector<16x128xf32>
    %cst = arith.constant 1.000000e+00 : bf16
    %4 = vector.broadcast %cst : bf16 to vector<16x128xbf16>
    %cst_1 = arith.constant 1.000000e+00 : f32
    %5 = vector.broadcast %cst_1 : f32 to vector<16x128xf32>
    %6 = arith.truncf %3 : vector<16x128xf32> to vector<16x128xbf16>
    %7 = arith.mulf %3, %3 : vector<16x128xf32>
    %8 = arith.subf %7, %5 : vector<16x128xf32>
    %9 = arith.truncf %8 : vector<16x128xf32> to vector<16x128xbf16>
    %10 = arith.mulf %3, %8 : vector<16x128xf32>
    %11 = arith.subf %10, %3 : vector<16x128xf32>
    %12 = arith.truncf %11 : vector<16x128xf32> to vector<16x128xbf16>
    %13 = arith.mulf %3, %11 : vector<16x128xf32>
    %14 = arith.subf %13, %8 : vector<16x128xf32>
    %15 = arith.truncf %14 : vector<16x128xf32> to vector<16x128xbf16>
    %16 = tpu.concatenate %4, %6, %9, %12, %15 in 0 : vector<16x128xbf16>, vector<16x128xbf16>, vector<16x128xbf16>, vector<16x128xbf16>, vector<16x128xbf16> -> vector<80x128xbf16>
    %c0_2 = arith.constant 0 : index
    %c0_3 = arith.constant 0 : index
    %17 = vector.load %arg2[%c0_2, %c0_3] : memref<32x80xbf16, #tpu.memory_space<vmem>>, vector<32x80xbf16>
    %cst_4 = arith.constant dense<0.000000e+00> : vector<32x128xf32>
    %18 = tpu.matmul %17, %16, %cst_4 {dimension_numbers = #tpu.dot_dimension_numbers<[1], [0], [0], [1], [0, 0, 1, 1], [], []>} : vector<32x80xbf16>, vector<80x128xbf16>, vector<32x128xf32> -> vector<32x128xf32>
    %19 = math.tanh %18 : vector<32x128xf32>
    %20 = arith.addf %19, %19 : vector<32x128xf32>
    %cst_5 = arith.constant 1.000000e+00 : bf16
    %21 = vector.broadcast %cst_5 : bf16 to vector<32x128xbf16>
    %cst_6 = arith.constant 1.000000e+00 : f32
    %22 = vector.broadcast %cst_6 : f32 to vector<32x128xf32>
    %23 = arith.truncf %20 : vector<32x128xf32> to vector<32x128xbf16>
    %24 = arith.mulf %20, %20 : vector<32x128xf32>
    %25 = arith.subf %24, %22 : vector<32x128xf32>
    %26 = arith.truncf %25 : vector<32x128xf32> to vector<32x128xbf16>
    %27 = arith.mulf %20, %25 : vector<32x128xf32>
    %28 = arith.subf %27, %20 : vector<32x128xf32>
    %29 = arith.truncf %28 : vector<32x128xf32> to vector<32x128xbf16>
    %30 = arith.mulf %20, %28 : vector<32x128xf32>
    %31 = arith.subf %30, %25 : vector<32x128xf32>
    %32 = arith.truncf %31 : vector<32x128xf32> to vector<32x128xbf16>
    %33 = tpu.concatenate %21, %23, %26, %29, %32 in 0 : vector<32x128xbf16>, vector<32x128xbf16>, vector<32x128xbf16>, vector<32x128xbf16>, vector<32x128xbf16> -> vector<160x128xbf16>
    %c0_7 = arith.constant 0 : index
    %c0_8 = arith.constant 0 : index
    %34 = vector.load %arg3[%c0_7, %c0_8] : memref<8x160xbf16, #tpu.memory_space<vmem>>, vector<8x160xbf16>
    %cst_9 = arith.constant dense<0.000000e+00> : vector<8x128xf32>
    %35 = tpu.matmul %34, %33, %cst_9 {dimension_numbers = #tpu.dot_dimension_numbers<[1], [0], [0], [1], [0, 0, 1, 1], [], []>} : vector<8x160xbf16>, vector<160x128xbf16>, vector<8x128xf32> -> vector<8x128xf32>
    %c0_10 = arith.constant 0 : index
    %c0_11 = arith.constant 0 : index
    %36 = vector.load %arg4[%c0_10, %c0_11] : memref<8x128xf32, #tpu.memory_space<vmem>>, vector<8x128xf32>
    tpu.vector_store %arg4[%c0_10, %c0_11], %35 {strides = array<i32>} : memref<8x128xf32, #tpu.memory_space<vmem>>, vector<8x128xf32>,
    return
  }
  func.func @transform_0(%arg0: i32) -> (i32, i32) {
    %c0_i32 = arith.constant 0 : i32
    %c0_i32_0 = arith.constant 0 : i32
    return %arg0, %c0_i32 : i32, i32
  }
  func.func @transform_1(%arg0: i32) -> (i32, i32) {
    %c0_i32 = arith.constant 0 : i32
    %c0_i32_0 = arith.constant 0 : i32
    %c0_i32_1 = arith.constant 0 : i32
    return %c0_i32, %c0_i32_0 : i32, i32
  }
  func.func @transform_2(%arg0: i32) -> (i32, i32) {
    %c0_i32 = arith.constant 0 : i32
    %c0_i32_0 = arith.constant 0 : i32
    %c0_i32_1 = arith.constant 0 : i32
    return %c0_i32, %c0_i32_0 : i32, i32
  }
  func.func @transform_3(%arg0: i32) -> (i32, i32) {
    %c0_i32 = arith.constant 0 : i32
    %c0_i32_0 = arith.constant 0 : i32
    return %c0_i32, %arg0 : i32, i32
  }
}

</mosaic_0001>

<llo_original>
// kernel: chebykan_forward.1
$region0: #{chebykan_forward.1}
  #allocation0 [shape = 'u32[]', space=smem, size = 0x4, offset = 0x4, fixed_abs, tag = 'smem constant byte address 0x4 - core index']
  #allocation1 [shape = 'u32[144,128]{1,0:T(1,128)}', space=vmem, size = 0x12000, scoped, tag = 'internal scratch']
  %s0 = inlined_call_operand.vmem [shape: f32[6,16], index: 0, kind: input, shape index: {}]
  %s1 = inlined_call_operand.vmem [shape: bf16[32,80], index: 1, kind: input, shape index: {}]
  %s2 = inlined_call_operand.vmem [shape: bf16[8,160], index: 2, kind: input, shape index: {}]
  %s3 = inlined_call_operand.vmem [shape: f32[8,6], index: 3, kind: output, shape index: {}]
  %s4 = sld [smem:[#allocation0]]
  $region22: #{chebykan_forward.1} parent=0
    _
  %s6 = ssub.s32 1, %s4
  %s7 = scalar_select 0, %s6, %s4
  // Predicated region
  $region2: #{chebykan_forward.1} parent=0 // pred_check
    _
  $region3: #{chebykan_forward.1} parent=0 // pred_check_branch
    %9 = sbr.rel (0) target = $region5
  $region4: #{chebykan_forward.1} parent=0 // pred_region
    _
  $region5: #{chebykan_forward.1} parent=0 // pred_fallthru
    _
  // Predicated region
  $region6: #{chebykan_forward.1} parent=0 // pred_check
    _
  $region7: #{chebykan_forward.1} parent=0 // pred_check_branch
    %11 = sbr.rel (0) target = $region9
  $region8: #{chebykan_forward.1} parent=0 // pred_region
    _
  $region9: #{chebykan_forward.1} parent=0 // pred_fallthru
    _
  // Predicated region
  $region10: #{chebykan_forward.1} parent=0 // pred_check
    _
  $region11: #{chebykan_forward.1} parent=0 // pred_check_branch
    %13 = sbr.rel (0) target = $region13
  $region12: #{chebykan_forward.1} parent=0 // pred_region
    _
  $region13: #{chebykan_forward.1} parent=0 // pred_fallthru
    _
  %v16 = vld [vmem:[%s0] sm:$0xff]
  %v17 = vld [vmem:[%s0 + $0x8] sm:$0xff]
  %v18 = vld [vmem:[%s0 + $0x10] sm:$0xff]
  %v19 = vld [vmem:[%s0 + $0x18] sm:$0xff]
  %v20 = vld [vmem:[%s0 + $0x20] sm:$0xff]
  %v21 = vld [vmem:[%s0 + $0x28] sm:$0xff]
  %v22 = vld [vmem:[%s0 + $0x30] sm:$0xff]
  %v23 = vld [vmem:[%s0 + $0x38] sm:$0xff]
  %v24 = vld [vmem:[%s0 + $0x40] sm:$0xff]
  %v25 = vld [vmem:[%s0 + $0x48] sm:$0xff]
  %v26 = vld [vmem:[%s0 + $0x50] sm:$0xff]
  %v27 = vld [vmem:[%s0 + $0x58] sm:$0xff]
  %v28 = vld [vmem:[%s0 + $0x60] sm:$0xff]
  %v29 = vld [vmem:[%s0 + $0x68] sm:$0xff]
  %v30 = vld [vmem:[%s0 + $0x70] sm:$0xff]
  %v31 = vld [vmem:[%s0 + $0x78] sm:$0xff]
  %32 = vxpose.xlu0.b32.start [1/16] %v16, 128
  %33 = vxpose.xlu0.b32.cont [2/16] %v17, 128
  %34 = vxpose.xlu0.b32.cont [3/16] %v18, 128
  %35 = vxpose.xlu0.b32.cont [4/16] %v19, 128
  %36 = vxpose.xlu0.b32.cont [5/16] %v20, 128
  %37 = vxpose.xlu0.b32.cont [6/16] %v21, 128
  %38 = vxpose.xlu0.b32.cont [7/16] %v22, 128
  %39 = vxpose.xlu0.b32.cont [8/16] %v23, 128
  %40 = vxpose.xlu0.b32.cont [9/16] %v24, 128
  %41 = vxpose.xlu0.b32.cont [10/16] %v25, 128
  %42 = vxpose.xlu0.b32.cont [11/16] %v26, 128
  %43 = vxpose.xlu0.b32.cont [12/16] %v27, 128
  %44 = vxpose.xlu0.b32.cont [13/16] %v28, 128
  %45 = vxpose.xlu0.b32.cont [14/16] %v29, 128
  %46 = vxpose.xlu0.b32.cont [15/16] %v30, 128
  %47 = vxpose.xlu0.b32.end [16/16] %v31, 128
  %v48 = vpop.trf.xlu0
  %v49 = vpop.trf.xlu0
  %v50 = vpop.trf.xlu0
  %v51 = vpop.trf.xlu0
  %v52 = vpop.trf.xlu0
  %v53 = vpop.trf.xlu0
  %v54 = vpop.trf.xlu0
  %v55 = vpop.trf.xlu0
  %v56 = vpop.trf.xlu0
  %v57 = vpop.trf.xlu0
  %v58 = vpop.trf.xlu0
  %v59 = vpop.trf.xlu0
  %v60 = vpop.trf.xlu0
  %v61 = vpop.trf.xlu0
  %v62 = vpop.trf.xlu0
  %v63 = vpop.trf.xlu0
  %v64 = vtanh.pop %v48
  %v65 = vtanh.pop %v49
  %v66 = vadd.f32 %v64, %v64
  %v67 = vadd.f32 %v65, %v65
  %v68 = vpack.c.bf16 %v67, %v66
  %v69 = vmul.f32 %v66, %v66
  %v70 = vmul.f32 %v67, %v67
  %v71 = vsub.f32 %v69, 1.0
  %v72 = vsub.f32 %v70, 1.0
  %v73 = vpack.c.bf16 %v72, %v71
  %v74 = vmul.f32 %v66, %v71
  %v75 = vmul.f32 %v67, %v72
  %v76 = vsub.f32 %v74, %v66
  %v77 = vsub.f32 %v75, %v67
  %v78 = vpack.c.bf16 %v77, %v76
  %v79 = vmul.f32 %v66, %v76
  %v80 = vmul.f32 %v67, %v77
  %v81 = vsub.f32 %v79, %v71
  %v82 = vsub.f32 %v80, %v72
  %v83 = vpack.c.bf16 %v82, %v81
  %v84 = vld [vmem:[%s1] sm:$0xf]
  %v85 = vld [vmem:[%s1 + $0x4] sm:$0xf]
  %v86 = vld [vmem:[%s1 + $0x8] sm:$0xf]
  %v87 = vld [vmem:[%s1 + $0xc] sm:$0xf]
  %v92 = vunpack.c.l.b16 %v84
  %v93 = vunpack.c.l.b16 %v85
  %v94 = vunpack.c.l.b16 %v86
  %v95 = vunpack.c.l.b16 %v87
  %v96 = vpack.c.b16 %v93, %v92
  %v97 = vpack.c.b16 %v95, %v94
  %vm98 = vcmask 654336
  %v100 = vsel %vm98, %v96, 0
  %v103 = vsel %vm98, %v97, 0
  %105 = vmatprep.subr.bf16.mxu0 0
  %106 = vmatpush1.bf16.msra.mxu0 1065369472
  %107 = vmatprep.subr.bf16.mxu0 0
  %108 = vmatpush1.bf16.msra.mxu0 %v68
  %109 = vmatprep.subr.bf16.mxu0 0
  %110 = vmatpush1.bf16.msra.mxu0 %v73
  %111 = vmatprep.subr.bf16.mxu0 0
  %112 = vmatpush1.bf16.msra.mxu0 %v78
  %113 = vmatprep.subr.bf16.mxu0 0
  %114 = vmatpush1.bf16.msra.mxu0 %v83
  %115 = vmatprep.subr.bf16.mxu0 0
  %116 = vmatpush1.bf16.msra.mxu0 0
  %117 = vmatprep.subr.bf16.mxu0 0
  %118 = vmatpush1.bf16.msra.mxu0 0
  %119 = vmatprep.subr.bf16.mxu0 0
  %120 = vmatpush1.bf16.msra.mxu0 0
  %121 = vmatprep.subr.bf16.mxu0 0
  %122 = vmatpush1.bf16.msra.mxu0 0
  %123 = vmatprep.subr.bf16.mxu0 0
  %124 = vmatpush1.bf16.msra.mxu0 0
  %125 = vmatprep.subr.bf16.mxu0 0
  %126 = vmatpush1.bf16.msra.mxu0 0
  %127 = vmatprep.subr.bf16.mxu0 0
  %128 = vmatpush1.bf16.msra.mxu0 0
  %129 = vmatprep.subr.bf16.mxu0 0
  %130 = vmatpush1.bf16.msra.mxu0 0
  %131 = vmatprep.subr.bf16.mxu0 0
  %132 = vmatpush1.bf16.msra.mxu0 0
  %133 = vmatprep.subr.bf16.mxu0 0
  %134 = vmatpush1.bf16.msra.mxu0 0
  %135 = vmatprep.subr.bf16.mxu0 0
  %136 = vmatpush1.bf16.msra.mxu0 0
  %137 = vmatprep.mubr.bf16.mxu0 0
  %138 = vmatmul.mubr.bf16.gmra.mrb[0].mxu0 %v100
  %v139 = vpop.f32.mrb[0].mxu0
  %v140 = vadd.f32 0.0, %v139
  %v141 = vpop.f32.mrb[0].mxu0
  %v142 = vpop.f32.mrb[0].mxu0
  %v143 = vadd.f32 0.0, %v142
  %v144 = vpop.f32.mrb[0].mxu0
  %145 = vmatprep.mubr.bf16.mxu0 0
  %146 = vmatmul.mubr.bf16.gmra.mrb[0].mxu0 %v103
  %v147 = vpop.f32.mrb[0].mxu0
  %v148 = vadd.f32 0.0, %v147
  %v149 = vpop.f32.mrb[0].mxu0
  %v150 = vpop.f32.mrb[0].mxu0
  %v151 = vadd.f32 0.0, %v150
  %v152 = vpop.f32.mrb[0].mxu0
  %153 = vdwg.mxu0
  %v154 = vtanh.pop %v140
  %v155 = vtanh.pop %v143
  %v156 = vtanh.pop %v148
  %v157 = vtanh.pop %v151
  %v158 = vadd.f32 %v154, %v154
  %v159 = vadd.f32 %v155, %v155
  %v160 = vadd.f32 %v156, %v156
  %v161 = vadd.f32 %v157, %v157
  %v162 = vpack.c.bf16 %v159, %v158
  %v163 = vpack.c.bf16 %v161, %v160
  %v164 = vmul.f32 %v158, %v158
  %v165 = vmul.f32 %v159, %v159
  %v166 = vmul.f32 %v160, %v160
  %v167 = vmul.f32 %v161, %v161
  %v168 = vsub.f32 %v164, 1.0
  %v169 = vsub.f32 %v165, 1.0
  %v170 = vsub.f32 %v166, 1.0
  %v171 = vsub.f32 %v167, 1.0
  %v172 = vpack.c.bf16 %v169, %v168
  %v173 = vpack.c.bf16 %v171, %v170
  %v174 = vmul.f32 %v158, %v168
  %v175 = vmul.f32 %v159, %v169
  %v176 = vmul.f32 %v160, %v170
  %v177 = vmul.f32 %v161, %v171
  %v178 = vsub.f32 %v174, %v158
  %v179 = vsub.f32 %v175, %v159
  %v180 = vsub.f32 %v176, %v160
  %v181 = vsub.f32 %v177, %v161
  %v182 = vpack.c.bf16 %v179, %v178
  %v183 = vpack.c.bf16 %v181, %v180
  %v184 = vmul.f32 %v158, %v178
  %v185 = vmul.f32 %v159, %v179
  %v186 = vmul.f32 %v160, %v180
  %v187 = vmul.f32 %v161, %v181
  %v188 = vsub.f32 %v184, %v168
  %v189 = vsub.f32 %v185, %v169
  %v190 = vsub.f32 %v186, %v170
  %v191 = vsub.f32 %v187, %v171
  %v192 = vpack.c.bf16 %v189, %v188
  %v193 = vpack.c.bf16 %v191, %v190
  %v194 = vld [vmem:[%s2] sm:$0xff]
  %v196 = vunpack.c.l.b16 %v194
  %v197 = vunpack.c.h.b16 %v194
  %v198 = vpack.c.b16 %v196, %v196
  %v199 = vpack.c.b16 %v197, %v197
  %vm201 = vcmask 261120
  %v203 = vsel %vm201, %v199, 0
  %205 = vmatprep.subr.bf16.mxu0 0
  %206 = vmatpush1.bf16.msra.mxu0 1065369472
  %207 = vmatprep.subr.bf16.mxu0 0
  %208 = vmatpush1.bf16.msra.mxu0 1065369472
  %209 = vmatprep.subr.bf16.mxu0 0
  %210 = vmatpush1.bf16.msra.mxu0 %v162
  %211 = vmatprep.subr.bf16.mxu0 0
  %212 = vmatpush1.bf16.msra.mxu0 %v163
  %213 = vmatprep.subr.bf16.mxu0 0
  %214 = vmatpush1.bf16.msra.mxu0 %v172
  %215 = vmatprep.subr.bf16.mxu0 0
  %216 = vmatpush1.bf16.msra.mxu0 %v173
  %217 = vmatprep.subr.bf16.mxu0 0
  %218 = vmatpush1.bf16.msra.mxu0 %v182
  %219 = vmatprep.subr.bf16.mxu0 0
  %220 = vmatpush1.bf16.msra.mxu0 %v183
  %221 = vmatprep.subr.bf16.mxu0 0
  %222 = vmatpush1.bf16.msra.mxu0 %v192
  %223 = vmatprep.subr.bf16.mxu0 0
  %224 = vmatpush1.bf16.msra.mxu0 %v193
  %225 = vmatprep.subr.bf16.mxu0 0
  %226 = vmatpush1.bf16.msra.mxu0 0
  %227 = vmatprep.subr.bf16.mxu0 0
  %228 = vmatpush1.bf16.msra.mxu0 0
  %229 = vmatprep.subr.bf16.mxu0 0
  %230 = vmatpush1.bf16.msra.mxu0 0
  %231 = vmatprep.subr.bf16.mxu0 0
  %232 = vmatpush1.bf16.msra.mxu0 0
  %233 = vmatprep.subr.bf16.mxu0 0
  %234 = vmatpush1.bf16.msra.mxu0 0
  %235 = vmatprep.subr.bf16.mxu0 0
  %236 = vmatpush1.bf16.msra.mxu0 0
  %237 = vmatprep.mubr.bf16.mxu0 %v203
  %238 = vmatmul.mubr.bf16.gmra.mrb[0].mxu0 %v198
  %v239 = vpop.f32.mrb[0].mxu0
  %v240 = vadd.f32 0.0, %v239
  %v241 = vpop.f32.mrb[0].mxu0
  %v242 = vpop.f32.mrb[0].mxu0
  %v243 = vpop.f32.mrb[0].mxu0
  %244 = vdwg.mxu0
  %245 = vst [vmem:[%s3] sm:$0xff] %v240
  // Predicated region
  $region14: #{chebykan_forward.1} parent=0 // pred_check
    _
  $region15: #{chebykan_forward.1} parent=0 // pred_check_branch
    %247 = sbr.rel (0) target = $region17
  $region16: #{chebykan_forward.1} parent=0 // pred_region
    _
  $region17: #{chebykan_forward.1} parent=0 // pred_fallthru
    _
  // Predicated region
  $region18: #{chebykan_forward.1} parent=0 // pred_check
    _
  $region19: #{chebykan_forward.1} parent=0 // pred_check_branch
    %249 = sbr.rel (0) target = $region21
  $region20: #{chebykan_forward.1} parent=0 // pred_region
    _
  $region21: #{chebykan_forward.1} parent=0 // pred_fallthru
    _

</llo_original>
